<compile_context>
chip_gen: v6e
topology: v6e:2x2x1
jax: 0.10.0
libtpu: 0.0.40
codegen_flags: <defaults>
</compile_context>

<pallas_src>
import jax
import jax.numpy as jnp
from jax.experimental import pallas as pl
from jax.experimental.pallas import tpu as pltpu

EPS = 1e-5


def _round_up(a, b):
    return (a + b - 1) // b * b


# ----------------------------- Pallas kernels ------------------------------

def _matmul_stats_kernel(p_ref, w_ref, y_ref, stats_ref):
    """Pass 1: one M-tile of one sub-convolution.

    p_ref:     (tm, Ksub)   bf16   patch tile
    w_ref:     (Ksub, Cpad) bf16   weight matrix (shared across M tiles)
    y_ref:     (tm, Cpad)   f32    pre-BN activations (written back to HBM)
    stats_ref: (8, Cpad)    f32    row 0 = per-channel sum, row 1 = sum of squares
    """
    y = jnp.dot(p_ref[...], w_ref[...], preferred_element_type=jnp.float32)
    y_ref[...] = y
    # Single-sweep BN statistics (sum / sum-of-squares); padded rows are zero so
    # they contribute nothing.
    ssum = jnp.sum(y, axis=0, keepdims=True)          # (1, Cpad)
    ssq = jnp.sum(y * y, axis=0, keepdims=True)       # (1, Cpad)
    row = jax.lax.broadcasted_iota(jnp.int32, stats_ref.shape, 0)
    stats_ref[...] = jnp.where(row == 0, ssum, jnp.where(row == 1, ssq, 0.0))


def _bn_relu_kernel(y_ref, scale_ref, shift_ref, o_ref):
    """Pass 2: folded batch-norm affine + ReLU on one M-tile (all f32)."""
    o_ref[...] = jnp.maximum(y_ref[...] * scale_ref[...] + shift_ref[...], 0.0)


# -------------------------------- wrapper ----------------------------------

def block_forward(x_nchw, weight, gamma, beta, *, stride, kernel_size, tm_max=256):
    """Forward pass of Block.

    x_nchw : (N, Cin, H, W) float32
    weight : (Cin, Cout, kH, kW) float32   (PyTorch ConvTranspose2d layout)
    gamma, beta : (Cout,) float32
    tm_max : max rows per M tile (256 keeps pass-1 VMEM well under v7x's budget)
    """
    pad = 0 if stride == 1 else 1
    k = kernel_size
    s = stride
    N, Cin, H, W = x_nchw.shape
    Cout = weight.shape[1]
    pe = k - 1 - pad                                   # effective forward-conv pad
    Ho = (H - 1) * s - 2 * pad + k
    Wo = (W - 1) * s - 2 * pad + k

    x = jnp.transpose(x_nchw, (0, 2, 3, 1)).astype(jnp.float32)          # NHWC
    # spatially flipped ConvTranspose weight, (kH, kW, Cin, Cout)
    wflip = jnp.transpose(jnp.flip(weight, (2, 3)), (2, 3, 0, 1)).astype(jnp.float32)

    Cpad = _round_up(Cout, 128)                        # lane-dense output columns

    patch_list, w_list = [], []
    subpixel = s > 1 and k % s == 0 and Ho % s == 0 and Wo % s == 0
    if subpixel:
        # ---- sub-pixel decomposition: s^2 stride-1 sub-convs on undilated x ----
        ks = k // s
        Hs, Ws = Ho // s, Wo // s
        xpad = jnp.pad(x, ((0, 0), (k, k), (k, k), (0, 0)))
        for r in range(s):
            a_r = (pe - r) % s
            d_r = (r + a_r - pe) // s
            for c in range(s):
                a_c = (pe - c) % s
                d_c = (c + a_c - pe) // s
                taps, wt = [], []
                for j in range(ks):
                    for l in range(ks):
                        taps.append(
                            xpad[:, k + d_r + j: k + d_r + j + Hs,
                                    k + d_c + l: k + d_c + l + Ws, :])
                        wt.append(wflip[a_r + s * j, a_c + s * l])       # (Cin, Cout)
                p = jnp.stack(taps, axis=3)             # (N, Hs, Ws, ks*ks, Cin)
                patch_list.append(p.reshape(N * Hs * Ws, ks * ks * Cin))
                w_list.append(jnp.stack(wt, axis=0).reshape(ks * ks * Cin, Cout))
        Msub, Ksub = N * Hs * Ws, ks * ks * Cin
    else:
        # ---- fallback: zero-dilate + pad + full im2col (also the stride==1 path) ----
        Hd = (H - 1) * s + 1
        Wd = (W - 1) * s + 1
        if s == 1:
            xd = x
        else:
            xd = jnp.zeros((N, Hd, Wd, Cin), x.dtype).at[:, ::s, ::s, :].set(x)
        xp = jnp.pad(xd, ((0, 0), (pe, pe), (pe, pe), (0, 0)))
        taps = []
        for kh in range(k):
            for kw in range(k):
                taps.append(xp[:, kh:kh + Ho, kw:kw + Wo, :])
        p = jnp.stack(taps, axis=3)                     # (N, Ho, Wo, k*k, Cin)
        patch_list.append(p.reshape(N * Ho * Wo, k * k * Cin))
        w_list.append(wflip.reshape(k * k * Cin, Cout))
        Msub, Ksub = N * Ho * Wo, k * k * Cin

    nsub = len(patch_list)
    M_true = N * Ho * Wo                                # true element count for BN stats

    tm = _round_up(min(tm_max, _round_up(Msub, 16)), 16)
    Msub_pad = _round_up(Msub, tm)
    nmt = Msub_pad // tm

    # bf16 MXU operands (f32 accumulation happens inside the kernel)
    patches = jnp.stack(patch_list, axis=0)                               # (nsub, Msub, Ksub)
    patches = jnp.pad(patches, ((0, 0), (0, Msub_pad - Msub), (0, 0))).astype(jnp.bfloat16)
    w_all = jnp.stack(w_list, axis=0)                                     # (nsub, Ksub, Cout)
    w_all = jnp.pad(w_all, ((0, 0), (0, 0), (0, Cpad - Cout))).astype(jnp.bfloat16)

    vmem_limit = 32 * 1024 * 1024
    flops1 = 2 * nsub * Msub_pad * Ksub * Cpad
    bytes1 = (patches.size * 2 + w_all.size * 2
              + nsub * Msub_pad * Cpad * 4 + nsub * nmt * 8 * Cpad * 4)

    # ---- pass 1: MXU matmul + per-tile partial BN statistics ----
    y_all, stats = pl.pallas_call(
        _matmul_stats_kernel,
        out_shape=(jax.ShapeDtypeStruct((nsub, Msub_pad, Cpad), jnp.float32),
                   jax.ShapeDtypeStruct((nsub, nmt, 8, Cpad), jnp.float32)),
        grid=(nsub, nmt),
        in_specs=[
            pl.BlockSpec((None, tm, Ksub), lambda q, i: (q, i, 0)),
            pl.BlockSpec((None, Ksub, Cpad), lambda q, i: (q, 0, 0)),
        ],
        out_specs=(
            pl.BlockSpec((None, tm, Cpad), lambda q, i: (q, i, 0)),
            pl.BlockSpec((None, None, 8, Cpad), lambda q, i: (q, i, 0, 0)),
        ),
        compiler_params=pltpu.CompilerParams(
            dimension_semantics=("parallel", "parallel"),
            vmem_limit_bytes=vmem_limit),
        cost_estimate=pl.CostEstimate(flops=flops1, transcendentals=0,
                                      bytes_accessed=bytes1),
    )(patches, w_all)

    # ---- fold BN statistics into per-channel scale/shift (tiny, stays in XLA) ----
    tot = jnp.sum(stats, axis=(0, 1))                   # (8, Cpad)
    mean = tot[0] / M_true
    var = jnp.maximum(tot[1] / M_true - mean * mean, 0.0)
    inv = jax.lax.rsqrt(var + EPS)
    gpad = jnp.pad(gamma.astype(jnp.float32), (0, Cpad - Cout))
    bpad = jnp.pad(beta.astype(jnp.float32), (0, Cpad - Cout))
    scale = (gpad * inv).reshape(1, Cpad)
    shift = (bpad - mean * gpad * inv).reshape(1, Cpad)

    # ---- pass 2: normalize + affine + ReLU over the same M tiles ----
    elems = nsub * Msub_pad * Cpad
    out_all = pl.pallas_call(
        _bn_relu_kernel,
        out_shape=jax.ShapeDtypeStruct((nsub, Msub_pad, Cpad), jnp.float32),
        grid=(nsub, nmt),
        in_specs=[
            pl.BlockSpec((None, tm, Cpad), lambda q, i: (q, i, 0)),
            pl.BlockSpec((1, Cpad), lambda q, i: (0, 0)),
            pl.BlockSpec((1, Cpad), lambda q, i: (0, 0)),
        ],
        out_specs=pl.BlockSpec((None, tm, Cpad), lambda q, i: (q, i, 0)),
        compiler_params=pltpu.CompilerParams(
            dimension_semantics=("parallel", "parallel"),
            vmem_limit_bytes=vmem_limit),
        cost_estimate=pl.CostEstimate(flops=2 * elems, transcendentals=0,
                                      bytes_accessed=2 * elems * 4 + 2 * Cpad * 4),
    )(y_all, scale, shift)

    # ---- assemble output back to NCHW ----
    if subpixel:
        out_valid = out_all[:, :Msub, :Cout].reshape(s, s, N, Ho // s, Wo // s, Cout)
        out_nhwc = jnp.transpose(out_valid, (2, 3, 0, 4, 1, 5)).reshape(N, Ho, Wo, Cout)
    else:
        out_nhwc = out_all[0, :Msub, :Cout].reshape(N, Ho, Wo, Cout)
    return jnp.transpose(out_nhwc, (0, 3, 1, 2))        # (N, Cout, Ho, Wo)


# ------------------------------- reference ---------------------------------

def _reference(x_nchw, weight, gamma, beta, *, stride, kernel_size):
    """Pure-JAX reference (different codepath) for validation."""
    pad = 0 if stride == 1 else 1
    k = kernel_size
    w_oihw = jnp.transpose(jnp.flip(weight, (2, 3)), (1, 0, 2, 3))
    y = jax.lax.conv_general_dilated(
        x_nchw, w_oihw, window_strides=(1, 1),
        padding=[(k - 1 - pad, k - 1 - pad)] * 2,
        lhs_dilation=(stride, stride),
        dimension_numbers=('NCHW', 'OIHW', 'NCHW'),
        preferred_element_type=jnp.float32)
    mean = y.mean(axis=(0, 2, 3), keepdims=True)
    var = ((y - mean) ** 2).mean(axis=(0, 2, 3), keepdims=True)
    yn = (y - mean) * jax.lax.rsqrt(var + EPS)
    yn = yn * gamma.reshape(1, -1, 1, 1) + beta.reshape(1, -1, 1, 1)
    return jnp.maximum(yn, 0.0)


if __name__ == "__main__":
    key = jax.random.PRNGKey(0)

    def run_case(name, N, Cin, Cout, H, W, stride, kernel_size, tm_max, kseed):
        kx, kw, kg, kb = jax.random.split(kseed, 4)
        x = jax.random.normal(kx, (N, Cin, H, W), dtype=jnp.float32)
        weight = 0.02 * jax.random.normal(
            kw, (Cin, Cout, kernel_size, kernel_size), dtype=jnp.float32)
        gamma = 1.0 + 0.1 * jax.random.normal(kg, (Cout,), jnp.float32)
        beta = 0.1 * jax.random.normal(kb, (Cout,), jnp.float32)

        out = jax.block_until_ready(
            block_forward(x, weight, gamma, beta,
                          stride=stride, kernel_size=kernel_size, tm_max=tm_max))
        Ho = (H - 1) * stride - (0 if stride == 1 else 2) + kernel_size
        assert out.shape == (N, Cout, Ho, Ho), (name, out.shape)

        ref = jax.block_until_ready(
            _reference(x, weight, gamma, beta, stride=stride, kernel_size=kernel_size))
        # bf16 MXU operands -> tolerance loosened vs the all-f32 version.
        err = float(jnp.max(jnp.abs(out - ref)))
        assert jnp.allclose(out, ref, atol=3e-2, rtol=3e-2), (name, err)

    k1, k2, k3 = jax.random.split(key, 3)
    # Main case: stride-2 upsampling block (sub-pixel decomposed path).
    run_case("s2_k4", N=2, Cin=4, Cout=8, H=8, W=8, stride=2, kernel_size=4,
             tm_max=256, kseed=k1)
    # Same case with tiny M tiles to exercise the multi-tile BN-stats reduction.
    run_case("s2_k4_tiled", N=2, Cin=4, Cout=8, H=8, W=8, stride=2, kernel_size=4,
             tm_max=32, kseed=k2)
    # Stride-1 block (padding=0, standard im2col path).
    run_case("s1_k3", N=2, Cin=4, Cout=8, H=8, W=8, stride=1, kernel_size=3,
             tm_max=256, kseed=k3)

    print("KERNEL_OK")
</pallas_src>

<mosaic_0001>
module attributes {stable_mosaic.version = 11 : i64} {
  func.func @_matmul_stats_kernel(%arg0: i32, %arg1: i32, %arg2: memref<1x128x16xbf16, #tpu.memory_space<vmem>>, %arg3: memref<1x16x128xbf16, #tpu.memory_space<vmem>>, %arg4: memref<1x128x128xf32, #tpu.memory_space<vmem>>, %arg5: memref<1x1x8x128xf32, #tpu.memory_space<vmem>>) attributes {dimension_semantics = [#tpu.dimension_semantics<parallel>, #tpu.dimension_semantics<parallel>], iteration_bounds = array<i64: 4, 1>, scalar_prefetch = 0 : i64, scratch_operands = 0 : i64, tpu.core_type = #tpu.core_type<tc>, window_params = [{transform_indices = @transform_0, window_bounds = array<i64: 1, 128, 16>}, {transform_indices = @transform_1, window_bounds = array<i64: 1, 16, 128>}, {transform_indices = @transform_2, window_bounds = array<i64: 1, 128, 128>}, {transform_indices = @transform_3, window_bounds = array<i64: 1, 1, 8, 128>}]} {
    %c0 = arith.constant 0 : index
    %c0_0 = arith.constant 0 : index
    %c0_1 = arith.constant 0 : index
    %0 = vector.load %arg2[%c0, %c0_0, %c0_1] : memref<1x128x16xbf16, #tpu.memory_space<vmem>>, vector<1x128x16xbf16>
    %1 = vector.shape_cast %0 : vector<1x128x16xbf16> to vector<128x16xbf16>
    %c0_2 = arith.constant 0 : index
    %c0_3 = arith.constant 0 : index
    %c0_4 = arith.constant 0 : index
    %2 = vector.load %arg3[%c0_2, %c0_3, %c0_4] : memref<1x16x128xbf16, #tpu.memory_space<vmem>>, vector<1x16x128xbf16>
    %3 = vector.shape_cast %2 : vector<1x16x128xbf16> to vector<16x128xbf16>
    %cst = arith.constant dense<0.000000e+00> : vector<128x128xf32>
    %4 = tpu.matmul %1, %3, %cst {dimension_numbers = #tpu.dot_dimension_numbers<[1], [0], [0], [1], [0, 0, 1, 1], [], []>} : vector<128x16xbf16>, vector<16x128xbf16>, vector<128x128xf32> -> vector<128x128xf32>
    %c0_5 = arith.constant 0 : index
    %c0_6 = arith.constant 0 : index
    %c0_7 = arith.constant 0 : index
    %5 = vector.load %arg4[%c0_5, %c0_6, %c0_7] : memref<1x128x128xf32, #tpu.memory_space<vmem>>, vector<1x128x128xf32>
    %6 = vector.shape_cast %5 : vector<1x128x128xf32> to vector<128x128xf32>
    %7 = vector.shape_cast %4 : vector<128x128xf32> to vector<1x128x128xf32>
    tpu.vector_store %arg4[%c0_5, %c0_6, %c0_7], %7 {strides = array<i32>} : memref<1x128x128xf32, #tpu.memory_space<vmem>>, vector<1x128x128xf32>,
    %cst_8 = arith.constant dense<0.000000e+00> : vector<128xf32>
    %8 = vector.multi_reduction <add>, %4, %cst_8 [0] : vector<128x128xf32> to vector<128xf32>
    %9 = vector.shape_cast %8 : vector<128xf32> to vector<1x128xf32>
    %10 = arith.mulf %4, %4 : vector<128x128xf32>
    %cst_9 = arith.constant dense<0.000000e+00> : vector<128xf32>
    %11 = vector.multi_reduction <add>, %10, %cst_9 [0] : vector<128x128xf32> to vector<128xf32>
    %12 = vector.shape_cast %11 : vector<128xf32> to vector<1x128xf32>
    %13 = tpu.iota {dimensions = array<i32: 0>} : vector<8x128xi32>
    %c0_i32 = arith.constant 0 : i32
    %14 = vector.broadcast %c0_i32 : i32 to vector<8x128xi32>
    %15 = arith.cmpi eq, %13, %14 : vector<8x128xi32>
    %c1_i32 = arith.constant 1 : i32
    %16 = vector.broadcast %c1_i32 : i32 to vector<8x128xi32>
    %17 = arith.cmpi eq, %13, %16 : vector<8x128xi32>
    %cst_10 = arith.constant 0.000000e+00 : f32
    %18 = vector.shape_cast %12 : vector<1x128xf32> to vector<1x128xf32>
    %19 = vector.broadcast %18 : vector<1x128xf32> to vector<8x128xf32>
    %20 = vector.broadcast %cst_10 : f32 to vector<8x128xf32>
    %21 = arith.select %17, %19, %20 : vector<8x128xi1>, vector<8x128xf32>
    %22 = vector.shape_cast %9 : vector<1x128xf32> to vector<1x128xf32>
    %23 = vector.broadcast %22 : vector<1x128xf32> to vector<8x128xf32>
    %24 = arith.select %15, %23, %21 : vector<8x128xi1>, vector<8x128xf32>
    %c0_11 = arith.constant 0 : index
    %c0_12 = arith.constant 0 : index
    %c0_13 = arith.constant 0 : index
    %c0_14 = arith.constant 0 : index
    %25 = vector.load %arg5[%c0_11, %c0_12, %c0_13, %c0_14] : memref<1x1x8x128xf32, #tpu.memory_space<vmem>>, vector<1x1x8x128xf32>
    %26 = vector.shape_cast %25 : vector<1x1x8x128xf32> to vector<8x128xf32>
    %27 = vector.shape_cast %24 : vector<8x128xf32> to vector<1x1x8x128xf32>
    tpu.vector_store %arg5[%c0_11, %c0_12, %c0_13, %c0_14], %27 {strides = array<i32>} : memref<1x1x8x128xf32, #tpu.memory_space<vmem>>, vector<1x1x8x128xf32>,
    return
  }
  func.func @transform_0(%arg0: i32, %arg1: i32) -> (i32, i32, i32) {
    %c0_i32 = arith.constant 0 : i32
    %c0_i32_0 = arith.constant 0 : i32
    return %arg0, %arg1, %c0_i32 : i32, i32, i32
  }
  func.func @transform_1(%arg0: i32, %arg1: i32) -> (i32, i32, i32) {
    %c0_i32 = arith.constant 0 : i32
    %c0_i32_0 = arith.constant 0 : i32
    %c0_i32_1 = arith.constant 0 : i32
    return %arg0, %c0_i32, %c0_i32_0 : i32, i32, i32
  }
  func.func @transform_2(%arg0: i32, %arg1: i32) -> (i32, i32, i32) {
    %c0_i32 = arith.constant 0 : i32
    %c0_i32_0 = arith.constant 0 : i32
    return %arg0, %arg1, %c0_i32 : i32, i32, i32
  }
  func.func @transform_3(%arg0: i32, %arg1: i32) -> (i32, i32, i32, i32) {
    %c0_i32 = arith.constant 0 : i32
    %c0_i32_0 = arith.constant 0 : i32
    %c0_i32_1 = arith.constant 0 : i32
    return %arg0, %arg1, %c0_i32, %c0_i32_0 : i32, i32, i32, i32
  }
}

</mosaic_0001>

<llo_original>
// kernel: tpu_custom_call.1
$region0: #{tpu_custom_call.1}
  #allocation0 [shape = 'u32[]', space=smem, size = 0x4, offset = 0x4, fixed_abs, tag = 'smem constant byte address 0x4 - core index']
  #allocation1 [shape = 'u32[144,128]{1,0:T(1,128)}', space=vmem, size = 0x12000, scoped, tag = 'internal scratch']
  %s0 = inlined_call_operand.vmem [shape: bf16[4,128,16], index: 0, kind: input, shape index: {}]
  %s1 = inlined_call_operand.vmem [shape: bf16[4,16,128], index: 1, kind: input, shape index: {}]
  %s2 = inlined_call_operand.hbm [shape: f32[4,128,128], index: 2, kind: output, shape index: {0}]
  %s3 = inlined_call_operand.hbm [shape: f32[4,1,8,128], index: 3, kind: output, shape index: {1}]
  %4 = xla_tuple %s2, %s3
  %s5 = sld [smem:[#allocation0]]
  $region49: #{tpu_custom_call.1} parent=0
    _
  %s7 = ssub.s32 1, %s5
  %s8 = scalar_select 0, %s7, %s5
  $region1: #{tpu_custom_call.1} parent=0
    #allocation2 [shape = 'u8[131072]{0}', space=vmem, size = 0x20000, scoped, tag = 'output window, operand 0']
    #allocation3 [shape = 's32[2]{0}', space=sflag, size = 0x8, scoped, tag = 'scoped memory for tpu_custom_call.1']
    #allocation4 [shape = 'u8[8192]{0}', space=vmem, size = 0x2000, scoped, tag = 'output window, operand 1']
    #allocation5 [shape = 's32[2]{0}', space=sflag, size = 0x8, scoped, tag = 'scoped memory for tpu_custom_call.1']
    %9 = vsyncpa [#allocation3], 0
    %s10 = scalar_lea.sflag [#allocation3], 1
    %11 = vsyncpa %s10, 0
    %12 = vsyncpa [#allocation5], 0
    %s13 = scalar_lea.sflag [#allocation5], 1
    %14 = vsyncpa %s13, 0
    loop: start=0, step=1, limit=6
    $region2: #{tpu_custom_call.1} parent=1 // loop_pre_header
      _
    $region3: #{tpu_custom_call.1} parent=1 // loop_header
      %s16 = sphi 0, %s20
      %p17 = scmp.ge.s32.totalorder %s16, 6
      %s23 = sphi 0, %s35
      %s24 = sphi 0, %s31
      %s25 = sphi 0, %s23
      %s26 = sphi 0, %s24
      %s27 = sphi 0, %s25
      %s28 = sphi 0, %s26
      %s40 = sphi 0, %s42
      %s43 = sphi 0, %s40
      %s44 = sphi 0, %s43
      %s60 = sphi 0, %s44
      %s66 = sphi 0, %s68
      %s69 = sphi 0, %s66
      %s70 = sphi 0, %s69
      %s86 = sphi 0, %s70
      %s94 = sphi 0, %s96
      %s97 = sphi 0, %s94
      %s98 = sphi 0, %s97
      %s114 = sphi 0, %s98
      %s122 = sphi 0, %s124
      %s125 = sphi 0, %s122
      %s126 = sphi 0, %s125
      %s142 = sphi 0, %s126
    $region4: #{tpu_custom_call.1} parent=1 // loop_header_branch
      %19 = sbr.rel (%p17) target = $region8
    $region5: #{tpu_custom_call.1} parent=1 // loop_body
      %s21 = ssub.s32 %s16, 1
      %s22 = ssub.s32 %s16, 2
      %s29 = sadd.s32 1, %s24
      %p30 = scmp.ge.s32.totalorder %s29, 1
      %s31 = scalar_select %p30, 0, %s29
      %s32 = sadd.s32 1, %s23
      %s33 = scalar_select %p30, %s32, %s23
      %p34 = scmp.ge.s32.totalorder %s33, 4
      %s35 = scalar_select %p34, 0, %s33
      %s36 = ssub.s32 %s23, %s35
      %s37 = ssub.s32 %s24, %s31
      %s38 = sor.u32 %s36, %s37
      %p39 = scmp.eq.s32.totalorder %s38, 0
      %s41 = sadd.s32 %s40, 1
      %s42 = scalar_select %p39, %s40, %s41
      %p45 = pneg %p39
      %p46 = scmp.eq.s32.totalorder %s16, 3
      %p47 = por %p45, %p46
      %p48 = scmp.ne.s32.totalorder %s40, %s43
      %p49 = scmp.eq.s32.totalorder %s16, 0
      %p50 = por %p48, %p49
      %p51 = scmp.ne.s32.totalorder %s40, %s43
      %p52 = scmp.eq.s32.totalorder %s21, 3
      %p53 = por %p51, %p52
      %p54 = scmp.ne.s32.totalorder %s43, %s44
      %p55 = scmp.eq.s32.totalorder %s21, 0
      %p56 = por %p54, %p55
      %p57 = scmp.ne.s32.totalorder %s43, %s44
      %p58 = scmp.eq.s32.totalorder %s22, 3
      %p59 = por %p57, %p58
      %p61 = scmp.ne.s32.totalorder %s44, %s60
      %p62 = scmp.eq.s32.totalorder %s22, 0
      %p63 = por %p61, %p62
      %s64 = ssub.s32 %s23, %s35
      %p65 = scmp.eq.s32.totalorder %s64, 0
      %s67 = sadd.s32 %s66, 1
      %s68 = scalar_select %p65, %s66, %s67
      %p71 = pneg %p65
      %p72 = scmp.eq.s32.totalorder %s16, 3
      %p73 = por %p71, %p72
      %p74 = scmp.ne.s32.totalorder %s66, %s69
      %p75 = scmp.eq.s32.totalorder %s16, 0
      %p76 = por %p74, %p75
      %p77 = scmp.ne.s32.totalorder %s66, %s69
      %p78 = scmp.eq.s32.totalorder %s21, 3
      %p79 = por %p77, %p78
      %p80 = scmp.ne.s32.totalorder %s69, %s70
      %p81 = scmp.eq.s32.totalorder %s21, 0
      %p82 = por %p80, %p81
      %p83 = scmp.ne.s32.totalorder %s69, %s70
      %p84 = scmp.eq.s32.totalorder %s22, 3
      %p85 = por %p83, %p84
      %p87 = scmp.ne.s32.totalorder %s70, %s86
      %p88 = scmp.eq.s32.totalorder %s22, 0
      %p89 = por %p87, %p88
      %s90 = ssub.s32 %s23, %s35
      %s91 = ssub.s32 %s24, %s31
      %s92 = sor.u32 %s90, %s91
      %p93 = scmp.eq.s32.totalorder %s92, 0
      %s95 = sadd.s32 %s94, 1
      %s96 = scalar_select %p93, %s94, %s95
      %p99 = pneg %p93
      %p100 = scmp.eq.s32.totalorder %s16, 3
      %p101 = por %p99, %p100
      %p102 = scmp.ne.s32.totalorder %s94, %s97
      %p103 = scmp.eq.s32.totalorder %s16, 0
      %p104 = por %p102, %p103
      %p105 = scmp.ne.s32.totalorder %s94, %s97
      %p106 = scmp.eq.s32.totalorder %s21, 3
      %p107 = por %p105, %p106
      %p108 = scmp.ne.s32.totalorder %s97, %s98
      %p109 = scmp.eq.s32.totalorder %s21, 0
      %p110 = por %p108, %p109
      %p111 = scmp.ne.s32.totalorder %s97, %s98
      %p112 = scmp.eq.s32.totalorder %s22, 3
      %p113 = por %p111, %p112
      %p115 = scmp.ne.s32.totalorder %s98, %s114
      %p116 = scmp.eq.s32.totalorder %s22, 0
      %p117 = por %p115, %p116
      %s118 = ssub.s32 %s23, %s35
      %s119 = ssub.s32 %s24, %s31
      %s120 = sor.u32 %s118, %s119
      %p121 = scmp.eq.s32.totalorder %s120, 0
      %s123 = sadd.s32 %s122, 1
      %s124 = scalar_select %p121, %s122, %s123
      %p127 = pneg %p121
      %p128 = scmp.eq.s32.totalorder %s16, 3
      %p129 = por %p127, %p128
      %p130 = scmp.ne.s32.totalorder %s122, %s125
      %p131 = scmp.eq.s32.totalorder %s16, 0
      %p132 = por %p130, %p131
      %p133 = scmp.ne.s32.totalorder %s122, %s125
      %p134 = scmp.eq.s32.totalorder %s21, 3
      %p135 = por %p133, %p134
      %p136 = scmp.ne.s32.totalorder %s125, %s126
      %p137 = scmp.eq.s32.totalorder %s21, 0
      %p138 = por %p136, %p137
      %p139 = scmp.ne.s32.totalorder %s125, %s126
      %p140 = scmp.eq.s32.totalorder %s22, 3
      %p141 = por %p139, %p140
      %p143 = scmp.ne.s32.totalorder %s126, %s142
      %p144 = scmp.eq.s32.totalorder %s22, 0
      %p145 = por %p143, %p144
      %p146 = scmp.le.s32.totalorder 1, %s16
      %p147 = scmp.lt.s32.totalorder %s16, 5
      %p148 = pnand %p146, %p147
      %p149 = pneg %p148
      // Predicated region
      $region9: #{tpu_custom_call.1} parent=5 // pred_check
        _
      $region10: #{tpu_custom_call.1} parent=5 // pred_check_branch
        %151 = sbr.rel (%p148) target = $region12
      $region11: #{tpu_custom_call.1} parent=5 // pred_region
        %s152 = ssub.s32 %s16, 1
      $region12: #{tpu_custom_call.1} parent=5 // pred_fallthru
        _
      %p153 = scmp.lt.s32.totalorder %s16, 4
      // Predicated region
      $region13: #{tpu_custom_call.1} parent=5 // pred_check
        %p154 = pneg %p153
      $region14: #{tpu_custom_call.1} parent=5 // pred_check_branch
        %156 = sbr.rel (%p154) target = $region16
      $region15: #{tpu_custom_call.1} parent=5 // pred_region
        // Predicated region
        $region17: #{tpu_custom_call.1} parent=15 // pred_check
          %p157 = pneg %p50
        $region18: #{tpu_custom_call.1} parent=15 // pred_check_branch
          %159 = sbr.rel (%p157) target = $region20
        $region19: #{tpu_custom_call.1} parent=15 // pred_region
          %s160 = smul.u32 16, %s24
          %p161 = scmp.lt.s32.totalorder %s23, 3
          %s162 = scalar_select %p161, %s23, 3
          %p163 = scmp.lt.s32.totalorder %s160, 15
          %s164 = scalar_select %p163, %s160, 15
          %s165 = smul.addr %s162, 16
          %s166 = sadd.s32 %s164, %s165
          %s167 = smul.addr %s166, 4
          %s168 = scalar_lea.vmem %s0, %s167
          %s169 = smul.u32 16, %s24
        $region20: #{tpu_custom_call.1} parent=15 // pred_fallthru
          _
        // Predicated region
        $region21: #{tpu_custom_call.1} parent=15 // pred_check
          %p170 = pneg %p76
        $region22: #{tpu_custom_call.1} parent=15 // pred_check_branch
          %172 = sbr.rel (%p170) target = $region24
        $region23: #{tpu_custom_call.1} parent=15 // pred_region
          %p173 = scmp.lt.s32.totalorder %s23, 3
          %s174 = scalar_select %p173, %s23, 3
          %s175 = smul.addr %s174, 2
          %s176 = smul.addr %s175, 4
          %s177 = scalar_lea.vmem %s1, %s176
        $region24: #{tpu_custom_call.1} parent=15 // pred_fallthru
          _
      $region16: #{tpu_custom_call.1} parent=5 // pred_fallthru
        _
      %p178 = scmp.le.s32.totalorder 1, %s16
      %p179 = scmp.lt.s32.totalorder %s16, 5
      %p180 = pnand %p178, %p179
      %p181 = pneg %p180
      // Predicated region
      $region25: #{tpu_custom_call.1} parent=5 // pred_check
        _
      $region26: #{tpu_custom_call.1} parent=5 // pred_check_branch
        %183 = sbr.rel (%p180) target = $region28
      $region27: #{tpu_custom_call.1} parent=5 // pred_region
        %s184 = ssub.s32 %s16, 1
        %s185 = smul.u32 16, %s26
        %p186 = scmp.lt.s32.totalorder %s25, 3
        %s187 = scalar_select %p186, %s25, 3
        %p188 = scmp.lt.s32.totalorder %s185, 15
        %s189 = scalar_select %p188, %s185, 15
        %s190 = smul.addr %s187, 16
        %s191 = sadd.s32 %s189, %s190
        %s192 = smul.addr %s191, 4
        %s193 = scalar_lea.vmem %s0, %s192
        %p194 = pneg %p56
        %p195 = pneg %p53
        %p196 = scmp.lt.s32.totalorder %s25, 3
        %s197 = scalar_select %p196, %s25, 3
        %s198 = smul.addr %s197, 2
        %s199 = smul.addr %s198, 4
        %s200 = scalar_lea.vmem %s1, %s199
        %p201 = pneg %p82
        %p202 = pneg %p79
        %p203 = pneg %p110
        %p204 = pneg %p107
        %s205 = sand.u32 %s97, 1
        %s206 = scalar_lea.sflag [#allocation3], %s205
        %s207 = sand.u32 %s97, 1
        %s208 = smul.addr %s207, 128
        %s209 = scalar_lea.vmem [#allocation2], %s208
        %p210 = pneg %p138
        %p211 = pneg %p135
        %s212 = sand.u32 %s125, 1
        %s213 = scalar_lea.sflag [#allocation5], %s212
        %s214 = sand.u32 %s125, 1
        %s215 = smul.addr %s214, 8
        %s216 = scalar_lea.vmem [#allocation4], %s215
        %s217 = smul.u32 16, %s26
        %p218 = scmp.lt.s32.totalorder %s25, 3
        %s219 = scalar_select %p218, %s25, 3
        %p220 = scmp.lt.s32.totalorder %s217, 15
        %s221 = scalar_select %p220, %s217, 15
        %s222 = smul.addr %s219, 16
        %s223 = sadd.s32 %s221, %s222
        %s224 = smul.addr %s223, 4
        %s225 = scalar_lea.vmem %s0, %s224
        %s226 = smul.u32 16, %s26
        %p227 = scmp.lt.s32.totalorder %s25, 3
        %s228 = scalar_select %p227, %s25, 3
        %s229 = smul.addr %s228, 2
        %s230 = smul.addr %s229, 4
        %s231 = scalar_lea.vmem %s1, %s230
        %s232 = smul.u32 16, %s26
        %v234 = vld [vmem:[%s225] sm:$0xf]
        %v235 = vld [vmem:[%s225 + $0x4] sm:$0xf]
        %v236 = vld [vmem:[%s225 + $0x8] sm:$0xf]
        %v237 = vld [vmem:[%s225 + $0xc] sm:$0xf]
        %v238 = vld [vmem:[%s225 + $0x10] sm:$0xf]
        %v239 = vld [vmem:[%s225 + $0x14] sm:$0xf]
        %v240 = vld [vmem:[%s225 + $0x18] sm:$0xf]
        %v241 = vld [vmem:[%s225 + $0x1c] sm:$0xf]
        %v242 = vld [vmem:[%s225 + $0x20] sm:$0xf]
        %v243 = vld [vmem:[%s225 + $0x24] sm:$0xf]
        %v244 = vld [vmem:[%s225 + $0x28] sm:$0xf]
        %v245 = vld [vmem:[%s225 + $0x2c] sm:$0xf]
        %v246 = vld [vmem:[%s225 + $0x30] sm:$0xf]
        %v247 = vld [vmem:[%s225 + $0x34] sm:$0xf]
        %v248 = vld [vmem:[%s225 + $0x38] sm:$0xf]
        %v249 = vld [vmem:[%s225 + $0x3c] sm:$0xf]
        %v250 = vld [vmem:[%s231] sm:$0xf]
        %v251 = vld [vmem:[%s231 + $0x4] sm:$0xf]
        %v268 = vunpack.c.l.b16 %v234
        %v269 = vunpack.c.l.b16 %v235
        %v270 = vunpack.c.l.b16 %v236
        %v271 = vunpack.c.l.b16 %v237
        %v272 = vunpack.c.l.b16 %v238
        %v273 = vunpack.c.l.b16 %v239
        %v274 = vunpack.c.l.b16 %v240
        %v275 = vunpack.c.l.b16 %v241
        %v276 = vunpack.c.l.b16 %v242
        %v277 = vunpack.c.l.b16 %v243
        %v278 = vunpack.c.l.b16 %v244
        %v279 = vunpack.c.l.b16 %v245
        %v280 = vunpack.c.l.b16 %v246
        %v281 = vunpack.c.l.b16 %v247
        %v282 = vunpack.c.l.b16 %v248
        %v283 = vunpack.c.l.b16 %v249
        %v284 = vpack.c.b16 %v269, %v268
        %v285 = vpack.c.b16 %v271, %v270
        %v286 = vpack.c.b16 %v273, %v272
        %v287 = vpack.c.b16 %v275, %v274
        %v288 = vpack.c.b16 %v277, %v276
        %v289 = vpack.c.b16 %v279, %v278
        %v290 = vpack.c.b16 %v281, %v280
        %v291 = vpack.c.b16 %v283, %v282
        %v294 = vunpack.c.l.b16 %v250
        %v295 = vunpack.c.l.b16 %v251
        %v296 = vpack.c.b16 %v295, %v294
        %vm298 = vcmask 130048
        %v300 = vsel %vm298, %v284, 0
        %v303 = vsel %vm298, %v285, 0
        %v306 = vsel %vm298, %v286, 0
        %v309 = vsel %vm298, %v287, 0
        %v312 = vsel %vm298, %v288, 0
        %v315 = vsel %vm298, %v289, 0
        %v318 = vsel %vm298, %v290, 0
        %v321 = vsel %vm298, %v291, 0
        %323 = vmatprep.subr.bf16.mxu0 0
        %324 = vmatpush1.bf16.msra.mxu0 0
        %325 = vmatprep.subr.bf16.mxu0 0
        %326 = vmatpush1.bf16.msra.mxu0 0
        %327 = vmatprep.subr.bf16.mxu0 0
        %328 = vmatpush1.bf16.msra.mxu0 0
        %329 = vmatprep.subr.bf16.mxu0 0
        %330 = vmatpush1.bf16.msra.mxu0 0
        %331 = vmatprep.subr.bf16.mxu0 0
        %332 = vmatpush1.bf16.msra.mxu0 0
        %333 = vmatprep.subr.bf16.mxu0 0
        %334 = vmatpush1.bf16.msra.mxu0 0
        %335 = vmatprep.subr.bf16.mxu0 0
        %336 = vmatpush1.bf16.msra.mxu0 0
        %337 = vmatprep.subr.bf16.mxu0 0
        %338 = vmatpush1.bf16.msra.mxu0 %v296
        %339 = vmatprep.subr.bf16.mxu0 0
        %340 = vmatpush2.bf16.msra.mxu0 0
        %341 = vmatprep.subr.bf16.mxu0 0
        %342 = vmatpush2.bf16.msra.mxu0 0
        %343 = vmatprep.subr.bf16.mxu0 0
        %344 = vmatpush2.bf16.msra.mxu0 0
        %345 = vmatprep.subr.bf16.mxu0 0
        %346 = vmatpush2.bf16.msra.mxu0 0
        %347 = vmatprep.subr.bf16.mxu0 0
        %348 = vmatpush2.bf16.msra.mxu0 0
        %349 = vmatprep.subr.bf16.mxu0 0
        %350 = vmatpush2.bf16.msra.mxu0 0
        %351 = vmatprep.subr.bf16.mxu0 0
        %352 = vmatpush2.bf16.msra.mxu0 0
        %353 = vmatprep.subr.bf16.mxu0 0
        %354 = vmatpush2.bf16.msra.mxu0 0
        %355 = vmatprep.mubr.bf16.mxu0 0
        %356 = vmatmul.mubr.bf16.gmra.mxu0 %v300
        %v357 = vpop.f32.mrf.mxu0
        %v358 = vadd.f32 0.0, %v357
        %v359 = vpop.f32.mrf.mxu0
        %v360 = vpop.f32.mrf.mxu0
        %v361 = vadd.f32 0.0, %v360
        %v362 = vpop.f32.mrf.mxu0
        %363 = vmatprep.mubr.bf16.mxu0 0
        %364 = vmatmul.mubr.bf16.gmra.mxu0 %v303
        %v365 = vpop.f32.mrf.mxu0
        %v366 = vadd.f32 0.0, %v365
        %v367 = vpop.f32.mrf.mxu0
        %v368 = vpop.f32.mrf.mxu0
        %v369 = vadd.f32 0.0, %v368
        %v370 = vpop.f32.mrf.mxu0
        %371 = vmatprep.mubr.bf16.mxu0 0
        %372 = vmatmul.mubr.bf16.gmra.mxu0 %v306
        %v373 = vpop.f32.mrf.mxu0
        %v374 = vadd.f32 0.0, %v373
        %v375 = vpop.f32.mrf.mxu0
        %v376 = vpop.f32.mrf.mxu0
        %v377 = vadd.f32 0.0, %v376
        %v378 = vpop.f32.mrf.mxu0
        %379 = vmatprep.mubr.bf16.mxu0 0
        %380 = vmatmul.mubr.bf16.gmra.mxu0 %v309
        %v381 = vpop.f32.mrf.mxu0
        %v382 = vadd.f32 0.0, %v381
        %v383 = vpop.f32.mrf.mxu0
        %v384 = vpop.f32.mrf.mxu0
        %v385 = vadd.f32 0.0, %v384
        %v386 = vpop.f32.mrf.mxu0
        %387 = vmatprep.mubr.bf16.mxu0 0
        %388 = vmatmul.mubr.bf16.gmra.mxu0 %v312
        %v389 = vpop.f32.mrf.mxu0
        %v390 = vadd.f32 0.0, %v389
        %v391 = vpop.f32.mrf.mxu0
        %v392 = vpop.f32.mrf.mxu0
        %v393 = vadd.f32 0.0, %v392
        %v394 = vpop.f32.mrf.mxu0
        %395 = vmatprep.mubr.bf16.mxu0 0
        %396 = vmatmul.mubr.bf16.gmra.mxu0 %v315
        %v397 = vpop.f32.mrf.mxu0
        %v398 = vadd.f32 0.0, %v397
        %v399 = vpop.f32.mrf.mxu0
        %v400 = vpop.f32.mrf.mxu0
        %v401 = vadd.f32 0.0, %v400
        %v402 = vpop.f32.mrf.mxu0
        %403 = vmatprep.mubr.bf16.mxu0 0
        %404 = vmatmul.mubr.bf16.gmra.mxu0 %v318
        %v405 = vpop.f32.mrf.mxu0
        %v406 = vadd.f32 0.0, %v405
        %v407 = vpop.f32.mrf.mxu0
        %v408 = vpop.f32.mrf.mxu0
        %v409 = vadd.f32 0.0, %v408
        %v410 = vpop.f32.mrf.mxu0
        %411 = vmatprep.mubr.bf16.mxu0 0
        %412 = vmatmul.mubr.bf16.gmra.mxu0 %v321
        %v413 = vpop.f32.mrf.mxu0
        %v414 = vadd.f32 0.0, %v413
        %v415 = vpop.f32.mrf.mxu0
        %v416 = vpop.f32.mrf.mxu0
        %v417 = vadd.f32 0.0, %v416
        %v418 = vpop.f32.mrf.mxu0
        %419 = vdwg.mxu0
        %420 = vst [vmem:[%s209] sm:$0xff] %v358
        %421 = vst [vmem:[%s209 + $0x8] sm:$0xff] %v361
        %422 = vst [vmem:[%s209 + $0x10] sm:$0xff] %v366
        %423 = vst [vmem:[%s209 + $0x18] sm:$0xff] %v369
        %424 = vst [vmem:[%s209 + $0x20] sm:$0xff] %v374
        %425 = vst [vmem:[%s209 + $0x28] sm:$0xff] %v377
        %426 = vst [vmem:[%s209 + $0x30] sm:$0xff] %v382
        %427 = vst [vmem:[%s209 + $0x38] sm:$0xff] %v385
        %428 = vst [vmem:[%s209 + $0x40] sm:$0xff] %v390
        %429 = vst [vmem:[%s209 + $0x48] sm:$0xff] %v393
        %430 = vst [vmem:[%s209 + $0x50] sm:$0xff] %v398
        %431 = vst [vmem:[%s209 + $0x58] sm:$0xff] %v401
        %432 = vst [vmem:[%s209 + $0x60] sm:$0xff] %v406
        %433 = vst [vmem:[%s209 + $0x68] sm:$0xff] %v409
        %434 = vst [vmem:[%s209 + $0x70] sm:$0xff] %v414
        %435 = vst [vmem:[%s209 + $0x78] sm:$0xff] %v417
        %v436 = vadd.f32 %v358, %v361
        %v437 = vadd.f32 %v436, %v366
        %v438 = vadd.f32 %v437, %v369
        %v439 = vadd.f32 %v438, %v374
        %v440 = vadd.f32 %v439, %v377
        %v441 = vadd.f32 %v440, %v382
        %v442 = vadd.f32 %v441, %v385
        %v443 = vadd.f32 %v442, %v390
        %v444 = vadd.f32 %v443, %v393
        %v445 = vadd.f32 %v444, %v398
        %v446 = vadd.f32 %v445, %v401
        %v447 = vadd.f32 %v446, %v406
        %v448 = vadd.f32 %v447, %v409
        %v449 = vadd.f32 %v448, %v414
        %v450 = vadd.f32 %v449, %v417
        %v451 = vrot.slane %v450, 4
        %v452 = vadd.f32 %v450, %v451
        %v453 = vrot.slane %v452, 2
        %v454 = vadd.f32 %v452, %v453
        %v455 = vrot.slane %v454, 1
        %v456 = vadd.f32 %v454, %v455
        %v457 = vmul.f32 %v358, %v358
        %v458 = vmul.f32 %v361, %v361
        %v459 = vmul.f32 %v366, %v366
        %v460 = vmul.f32 %v369, %v369
        %v461 = vmul.f32 %v374, %v374
        %v462 = vmul.f32 %v377, %v377
        %v463 = vmul.f32 %v382, %v382
        %v464 = vmul.f32 %v385, %v385
        %v465 = vmul.f32 %v390, %v390
        %v466 = vmul.f32 %v393, %v393
        %v467 = vmul.f32 %v398, %v398
        %v468 = vmul.f32 %v401, %v401
        %v469 = vmul.f32 %v406, %v406
        %v470 = vmul.f32 %v409, %v409
        %v471 = vmul.f32 %v414, %v414
        %v472 = vmul.f32 %v417, %v417
        %v473 = vadd.f32 %v457, %v458
        %v474 = vadd.f32 %v473, %v459
        %v475 = vadd.f32 %v474, %v460
        %v476 = vadd.f32 %v475, %v461
        %v477 = vadd.f32 %v476, %v462
        %v478 = vadd.f32 %v477, %v463
        %v479 = vadd.f32 %v478, %v464
        %v480 = vadd.f32 %v479, %v465
        %v481 = vadd.f32 %v480, %v466
        %v482 = vadd.f32 %v481, %v467
        %v483 = vadd.f32 %v482, %v468
        %v484 = vadd.f32 %v483, %v469
        %v485 = vadd.f32 %v484, %v470
        %v486 = vadd.f32 %v485, %v471
        %v487 = vadd.f32 %v486, %v472
        %v488 = vrot.slane %v487, 4
        %v489 = vadd.f32 %v487, %v488
        %v490 = vrot.slane %v489, 2
        %v491 = vadd.f32 %v489, %v490
        %v492 = vrot.slane %v491, 1
        %v493 = vadd.f32 %v491, %v492
        %v494 = vlaneseq
        %v495 = vshrl.u32 %v494, 7
        %vm496 = vcmp.eq.s32.totalorder %v495, 0
        %vm497 = vcmp.eq.s32.totalorder %v495, 1
        %v498 = vsel %vm497, %v493, 0.0
        %v499 = vsel %vm496, %v456, %v498
        %500 = vst [vmem:[%s216] sm:$0xff] %v499
        %s501 = sand.u32 %s97, 1
        %s502 = scalar_lea.sflag [#allocation3], %s501
        %s503 = sand.u32 %s97, 1
        %s504 = smul.addr %s503, 128
        %s505 = scalar_lea.vmem [#allocation2], %s504
        %s506 = sand.u32 %s125, 1
        %s507 = scalar_lea.sflag [#allocation5], %s506
        %s508 = sand.u32 %s125, 1
        %s509 = smul.addr %s508, 8
        %s510 = scalar_lea.vmem [#allocation4], %s509
        // Predicated region
        $region29: #{tpu_custom_call.1} parent=27 // pred_check
          %p511 = pneg %p107
        $region30: #{tpu_custom_call.1} parent=27 // pred_check_branch
          %513 = sbr.rel (%p511) target = $region32
        $region31: #{tpu_custom_call.1} parent=27 // pred_region
          %s514 = smul.u32 16, %s26
          %s516 = ssub.s32 2048, 2048
          %517 = vsyncadd %s502, %s516
          %s518 = smul.addr %s25, 16
          %s519 = sadd.s32 %s514, %s518
          %s520 = smul.addr %s519, 128
          %s521 = scalar_lea.hbm %s2, %s520
          %s522 = sshll.u32 %s505, 4
          %s523 = int_to_ptr.vmem [resolvable:$true] %s522
          %528 = dma.vmem_to_hbm [thread:$0]  %s523, 2048, %s521, %s502, 128, 128, 8
        $region32: #{tpu_custom_call.1} parent=27 // pred_fallthru
          _
        // Predicated region
        $region33: #{tpu_custom_call.1} parent=27 // pred_check
          %p529 = pneg %p135
        $region34: #{tpu_custom_call.1} parent=27 // pred_check_branch
          %531 = sbr.rel (%p529) target = $region36
        $region35: #{tpu_custom_call.1} parent=27 // pred_region
          %s533 = ssub.s32 128, 128
          %534 = vsyncadd %s507, %s533
          %s535 = sadd.s32 %s26, %s25
          %s536 = smul.addr %s535, 128
          %s537 = scalar_lea.hbm %s3, %s536
          %s539 = sshll.u32 %s510, 4
          %s540 = int_to_ptr.vmem [resolvable:$true] %s539
          %542 = dma.vmem_to_hbm [thread:$0]  %s540, 128, %s537, %s507
        $region36: #{tpu_custom_call.1} parent=27 // pred_fallthru
          _
      $region28: #{tpu_custom_call.1} parent=5 // pred_fallthru
        _
      %p543 = scmp.le.s32.totalorder 2, %s16
      // Predicated region
      $region37: #{tpu_custom_call.1} parent=5 // pred_check
        %p544 = pneg %p543
      $region38: #{tpu_custom_call.1} parent=5 // pred_check_branch
        %546 = sbr.rel (%p544) target = $region40
      $region39: #{tpu_custom_call.1} parent=5 // pred_region
        %s547 = ssub.s32 %s16, 2
        // Predicated region
        $region41: #{tpu_custom_call.1} parent=39 // pred_check
          %p548 = pneg %p113
        $region42: #{tpu_custom_call.1} parent=39 // pred_check_branch
          %550 = sbr.rel (%p548) target = $region44
        $region43: #{tpu_custom_call.1} parent=39 // pred_region
          %s551 = sand.u32 %s98, 1
          %s552 = scalar_lea.sflag [#allocation3], %s551
          %s553 = sand.u32 %s98, 1
          %s554 = smul.addr %s553, 128
          %s555 = scalar_lea.vmem [#allocation2], %s554
          %556 = dma.done %s552, 2048
        $region44: #{tpu_custom_call.1} parent=39 // pred_fallthru
          _
        // Predicated region
        $region45: #{tpu_custom_call.1} parent=39 // pred_check
          %p557 = pneg %p141
        $region46: #{tpu_custom_call.1} parent=39 // pred_check_branch
          %559 = sbr.rel (%p557) target = $region48
        $region47: #{tpu_custom_call.1} parent=39 // pred_region
          %s560 = sand.u32 %s126, 1
          %s561 = scalar_lea.sflag [#allocation5], %s560
          %s562 = sand.u32 %s126, 1
          %s563 = smul.addr %s562, 8
          %s564 = scalar_lea.vmem [#allocation4], %s563
          %565 = dma.done %s561, 128
        $region48: #{tpu_custom_call.1} parent=39 // pred_fallthru
          _
      $region40: #{tpu_custom_call.1} parent=5 // pred_fallthru
        _
    $region6: #{tpu_custom_call.1} parent=1 // loop_footer
      %s20 = sadd.s32 1, %s16
    $region7: #{tpu_custom_call.1} parent=1 // loop_footer_branch
      %15 = sbr.rel target = $region3
    $region8: #{tpu_custom_call.1} parent=1 // loop_exit
      _
    %566 = vsyncpa [#allocation3], 1
    %s567 = scalar_lea.sflag [#allocation3], 1
    %568 = vsyncpa %s567, 1
    %569 = vsyncpa [#allocation5], 1
    %s570 = scalar_lea.sflag [#allocation5], 1
    %571 = vsyncpa %s570, 1

</llo_original>
